<compile_context>
chip_gen: v5e
topology: v5e:2x2
jax: 0.10.0
libtpu: 0.0.40
codegen_flags: <defaults>
</compile_context>

<pallas_src>
import jax
import jax.numpy as jnp
from jax.experimental import pallas as pl
from jax.experimental.pallas import tpu as pltpu

HIDDEN1 = 64
HIDDEN2 = 32
SUBLANE = 8


def _round_up(n, m):
    return ((n + m - 1) // m) * m


def _cdiv(a, b):
    return (a + b - 1) // b


def mlp_kernel(x_ref, w1_ref, b1_ref, w2_ref, b2_ref, w3_ref, b3_ref, o_ref):
    # Cast the streamed x tile to bf16 in-kernel (hidden under the DMA pipeline).
    x = x_ref[...].astype(w1_ref.dtype)
    # Layer 1: Linear(input, 64) + ReLU. bf16 operands, f32 accumulation on the MXU.
    h1 = jnp.dot(x, w1_ref[...], preferred_element_type=jnp.float32)
    h1 = jnp.maximum(h1 + b1_ref[...], 0.0)          # f32 elementwise (v5e-safe)
    # Layer 2: Linear(64, 32) + ReLU.
    h2 = jnp.dot(h1.astype(w2_ref.dtype), w2_ref[...],
                 preferred_element_type=jnp.float32)
    h2 = jnp.maximum(h2 + b2_ref[...], 0.0)
    # Layer 3: Linear(32, num_classes), no activation. Narrow store (num_classes cols).
    out = jnp.dot(h2.astype(w3_ref.dtype), w3_ref[...],
                  preferred_element_type=jnp.float32)
    o_ref[...] = (out + b3_ref[...]).astype(o_ref.dtype)


def prepare_params(params, compute_dtype=jnp.bfloat16):
    """One-time param prep: cast weights to bf16, keep biases f32 as (1, N) rows."""
    return {
        "w1": params["w1"].astype(compute_dtype),
        "b1": params["b1"].reshape(1, -1).astype(jnp.float32),
        "w2": params["w2"].astype(compute_dtype),
        "b2": params["b2"].reshape(1, -1).astype(jnp.float32),
        "w3": params["w3"].astype(compute_dtype),
        "b3": params["b3"].reshape(1, -1).astype(jnp.float32),
    }


def neural_network_forward(x, prepared, *, block_batch=1024):
    """x: [B, input_size] float32. prepared: output of prepare_params()."""
    w1, b1 = prepared["w1"], prepared["b1"]
    w2, b2 = prepared["w2"], prepared["b2"]
    w3, b3 = prepared["w3"], prepared["b3"]
    B, F = x.shape
    num_classes = w3.shape[1]

    # Batch tile: large for pipelining / per-step-overhead amortization, capped so
    # tiny batches remain a single grid step. Ragged last block handled by cdiv grid.
    TB = min(block_batch, _round_up(B, SUBLANE))
    steps = _cdiv(B, TB)
    # v7x megacore: with a multi-step grid, prefer an even step count so the two
    # TensorCores split the batch axis evenly (no-op on v5e/v6e).
    if steps > 1 and steps % 2 == 1:
        tb_alt = _round_up(_cdiv(B, steps + 1), SUBLANE)
        if tb_alt >= SUBLANE and _cdiv(B, tb_alt) % 2 == 0:
            TB = tb_alt
            steps = _cdiv(B, TB)

    grid = (steps,)

    # Weights/biases: full blocks with a constant index_map -> loaded once and
    # VMEM-resident across all batch tiles (~13 KB total).
    def const_spec(a):
        return pl.BlockSpec(a.shape, lambda i: (0,) * a.ndim)

    out = pl.pallas_call(
        mlp_kernel,
        out_shape=jax.ShapeDtypeStruct((B, num_classes), jnp.float32),
        grid=grid,
        in_specs=[
            # x: batch-tiled, f32 streamed straight from HBM (last dim == full extent).
            pl.BlockSpec((TB, F), lambda i: (i, 0)),
            const_spec(w1), const_spec(b1),
            const_spec(w2), const_spec(b2),
            const_spec(w3), const_spec(b3),
        ],
        # Narrow output: last dim == full array extent (num_classes), no lane padding.
        out_specs=pl.BlockSpec((TB, num_classes), lambda i: (i, 0)),
        compiler_params=pltpu.CompilerParams(
            dimension_semantics=("parallel",),   # megacore on v7x, no-op elsewhere
        ),
    )(x, w1, b1, w2, b2, w3, b3)

    return out


def reference_forward(x, prepared):
    """Plain-JAX reference mirroring the kernel's numerics (bf16 matmul in, f32 acc)."""
    cd = prepared["w1"].dtype
    h1 = jnp.maximum(
        jnp.dot(x.astype(cd), prepared["w1"], preferred_element_type=jnp.float32)
        + prepared["b1"], 0.0)
    h2 = jnp.maximum(
        jnp.dot(h1.astype(cd), prepared["w2"], preferred_element_type=jnp.float32)
        + prepared["b2"], 0.0)
    return (jnp.dot(h2.astype(cd), prepared["w3"],
                    preferred_element_type=jnp.float32) + prepared["b3"])


def init_params(key, input_size, num_classes):
    """Deterministic synthetic init (PyTorch-Linear-like uniform fan-in scaling)."""
    ks = jax.random.split(key, 6)

    def linear(kw, kb, fan_in, fan_out):
        bound = 1.0 / jnp.sqrt(fan_in)
        w = jax.random.uniform(kw, (fan_in, fan_out), jnp.float32, -bound, bound)
        b = jax.random.uniform(kb, (1, fan_out), jnp.float32, -bound, bound)
        return w, b

    w1, b1 = linear(ks[0], ks[1], input_size, HIDDEN1)
    w2, b2 = linear(ks[2], ks[3], HIDDEN1, HIDDEN2)
    w3, b3 = linear(ks[4], ks[5], HIDDEN2, num_classes)
    return {"w1": w1, "b1": b1, "w2": w2, "b2": b2, "w3": w3, "b3": b3}


if __name__ == "__main__":
    key = jax.random.PRNGKey(0)
    k_x, k_x2, k_p = jax.random.split(key, 3)

    # KDD-style small example: 41 features, 5 classes.
    input_size, num_classes = 41, 5
    params = init_params(k_p, input_size, num_classes)
    prepared = prepare_params(params)   # one-time weight cast (hoisted out of forward)

    # Small batch (single grid step).
    batch = 8
    x = jax.random.normal(k_x, (batch, input_size), jnp.float32)
    out = neural_network_forward(x, prepared)
    jax.block_until_ready(out)
    ref = reference_forward(x, prepared)
    assert out.shape == (batch, num_classes)
    assert jnp.allclose(out, ref, atol=1e-2, rtol=1e-2)

    # Larger, non-multiple batch: exercises cdiv grid + ragged last block + even
    # step count (2050 rows -> 4 steps of 520 rows, last block partially masked).
    batch2 = 2050
    x2 = jax.random.normal(k_x2, (batch2, input_size), jnp.float32)
    out2 = neural_network_forward(x2, prepared)
    jax.block_until_ready(out2)
    ref2 = reference_forward(x2, prepared)
    assert out2.shape == (batch2, num_classes)
    assert jnp.allclose(out2, ref2, atol=1e-2, rtol=1e-2)

    print("KERNEL_OK")
</pallas_src>

<mosaic_0001>
module attributes {stable_mosaic.version = 11 : i64} {
  func.func @mlp_kernel(%arg0: i32, %arg1: memref<8x41xf32, #tpu.memory_space<vmem>>, %arg2: memref<41x64xbf16, #tpu.memory_space<vmem>>, %arg3: memref<1x64xf32, #tpu.memory_space<vmem>>, %arg4: memref<64x32xbf16, #tpu.memory_space<vmem>>, %arg5: memref<1x32xf32, #tpu.memory_space<vmem>>, %arg6: memref<32x5xbf16, #tpu.memory_space<vmem>>, %arg7: memref<1x5xf32, #tpu.memory_space<vmem>>, %arg8: memref<8x5xf32, #tpu.memory_space<vmem>>) attributes {dimension_semantics = [#tpu.dimension_semantics<parallel>], iteration_bounds = array<i64: 1>, scalar_prefetch = 0 : i64, scratch_operands = 0 : i64, tpu.core_type = #tpu.core_type<tc>, window_params = [{transform_indices = @transform_0, window_bounds = array<i64: 8, 41>}, {pipeline_mode = #tpu.pipeline_mode<synchronous>, transform_indices = @transform_1, window_bounds = array<i64: 41, 64>}, {pipeline_mode = #tpu.pipeline_mode<synchronous>, transform_indices = @transform_2, window_bounds = array<i64: 1, 64>}, {pipeline_mode = #tpu.pipeline_mode<synchronous>, transform_indices = @transform_3, window_bounds = array<i64: 64, 32>}, {pipeline_mode = #tpu.pipeline_mode<synchronous>, transform_indices = @transform_4, window_bounds = array<i64: 1, 32>}, {pipeline_mode = #tpu.pipeline_mode<synchronous>, transform_indices = @transform_5, window_bounds = array<i64: 32, 5>}, {pipeline_mode = #tpu.pipeline_mode<synchronous>, transform_indices = @transform_6, window_bounds = array<i64: 1, 5>}, {transform_indices = @transform_7, window_bounds = array<i64: 8, 5>}]} {
    %c0 = arith.constant 0 : index
    %c0_0 = arith.constant 0 : index
    %0 = vector.load %arg1[%c0, %c0_0] : memref<8x41xf32, #tpu.memory_space<vmem>>, vector<8x41xf32>
    %1 = arith.truncf %0 : vector<8x41xf32> to vector<8x41xbf16>
    %c0_1 = arith.constant 0 : index
    %c0_2 = arith.constant 0 : index
    %2 = vector.load %arg2[%c0_1, %c0_2] : memref<41x64xbf16, #tpu.memory_space<vmem>>, vector<41x64xbf16>
    %cst = arith.constant dense<0.000000e+00> : vector<8x64xf32>
    %3 = tpu.matmul %1, %2, %cst {dimension_numbers = #tpu.dot_dimension_numbers<[1], [0], [0], [1], [0, 0, 1, 1], [], []>} : vector<8x41xbf16>, vector<41x64xbf16>, vector<8x64xf32> -> vector<8x64xf32>
    %c0_3 = arith.constant 0 : index
    %c0_4 = arith.constant 0 : index
    %4 = vector.load %arg3[%c0_3, %c0_4] : memref<1x64xf32, #tpu.memory_space<vmem>>, vector<1x64xf32>
    %5 = vector.broadcast %4 : vector<1x64xf32> to vector<8x64xf32>
    %6 = arith.addf %3, %5 : vector<8x64xf32>
    %cst_5 = arith.constant 0.000000e+00 : f32
    %7 = vector.broadcast %cst_5 : f32 to vector<8x64xf32>
    %8 = arith.maximumf %6, %7 : vector<8x64xf32>
    %9 = arith.truncf %8 : vector<8x64xf32> to vector<8x64xbf16>
    %c0_6 = arith.constant 0 : index
    %c0_7 = arith.constant 0 : index
    %10 = vector.load %arg4[%c0_6, %c0_7] : memref<64x32xbf16, #tpu.memory_space<vmem>>, vector<64x32xbf16>
    %cst_8 = arith.constant dense<0.000000e+00> : vector<8x32xf32>
    %11 = tpu.matmul %9, %10, %cst_8 {dimension_numbers = #tpu.dot_dimension_numbers<[1], [0], [0], [1], [0, 0, 1, 1], [], []>} : vector<8x64xbf16>, vector<64x32xbf16>, vector<8x32xf32> -> vector<8x32xf32>
    %c0_9 = arith.constant 0 : index
    %c0_10 = arith.constant 0 : index
    %12 = vector.load %arg5[%c0_9, %c0_10] : memref<1x32xf32, #tpu.memory_space<vmem>>, vector<1x32xf32>
    %13 = vector.broadcast %12 : vector<1x32xf32> to vector<8x32xf32>
    %14 = arith.addf %11, %13 : vector<8x32xf32>
    %cst_11 = arith.constant 0.000000e+00 : f32
    %15 = vector.broadcast %cst_11 : f32 to vector<8x32xf32>
    %16 = arith.maximumf %14, %15 : vector<8x32xf32>
    %17 = arith.truncf %16 : vector<8x32xf32> to vector<8x32xbf16>
    %c0_12 = arith.constant 0 : index
    %c0_13 = arith.constant 0 : index
    %18 = vector.load %arg6[%c0_12, %c0_13] : memref<32x5xbf16, #tpu.memory_space<vmem>>, vector<32x5xbf16>
    %cst_14 = arith.constant dense<0.000000e+00> : vector<8x5xf32>
    %19 = tpu.matmul %17, %18, %cst_14 {dimension_numbers = #tpu.dot_dimension_numbers<[1], [0], [0], [1], [0, 0, 1, 1], [], []>} : vector<8x32xbf16>, vector<32x5xbf16>, vector<8x5xf32> -> vector<8x5xf32>
    %c0_15 = arith.constant 0 : index
    %c0_16 = arith.constant 0 : index
    %20 = vector.load %arg7[%c0_15, %c0_16] : memref<1x5xf32, #tpu.memory_space<vmem>>, vector<1x5xf32>
    %21 = vector.broadcast %20 : vector<1x5xf32> to vector<8x5xf32>
    %22 = arith.addf %19, %21 : vector<8x5xf32>
    %c0_17 = arith.constant 0 : index
    %c0_18 = arith.constant 0 : index
    %23 = vector.load %arg8[%c0_17, %c0_18] : memref<8x5xf32, #tpu.memory_space<vmem>>, vector<8x5xf32>
    tpu.vector_store %arg8[%c0_17, %c0_18], %22 {strides = array<i32>} : memref<8x5xf32, #tpu.memory_space<vmem>>, vector<8x5xf32>,
    return
  }
  func.func @transform_0(%arg0: i32) -> (i32, i32) {
    %c0_i32 = arith.constant 0 : i32
    %c0_i32_0 = arith.constant 0 : i32
    return %arg0, %c0_i32 : i32, i32
  }
  func.func @transform_1(%arg0: i32) -> (i32, i32) {
    %c0_i32 = arith.constant 0 : i32
    %c0_i32_0 = arith.constant 0 : i32
    %c0_i32_1 = arith.constant 0 : i32
    return %c0_i32, %c0_i32_0 : i32, i32
  }
  func.func @transform_2(%arg0: i32) -> (i32, i32) {
    %c0_i32 = arith.constant 0 : i32
    %c0_i32_0 = arith.constant 0 : i32
    %c0_i32_1 = arith.constant 0 : i32
    return %c0_i32, %c0_i32_0 : i32, i32
  }
  func.func @transform_3(%arg0: i32) -> (i32, i32) {
    %c0_i32 = arith.constant 0 : i32
    %c0_i32_0 = arith.constant 0 : i32
    %c0_i32_1 = arith.constant 0 : i32
    return %c0_i32, %c0_i32_0 : i32, i32
  }
  func.func @transform_4(%arg0: i32) -> (i32, i32) {
    %c0_i32 = arith.constant 0 : i32
    %c0_i32_0 = arith.constant 0 : i32
    %c0_i32_1 = arith.constant 0 : i32
    return %c0_i32, %c0_i32_0 : i32, i32
  }
  func.func @transform_5(%arg0: i32) -> (i32, i32) {
    %c0_i32 = arith.constant 0 : i32
    %c0_i32_0 = arith.constant 0 : i32
    %c0_i32_1 = arith.constant 0 : i32
    return %c0_i32, %c0_i32_0 : i32, i32
  }
  func.func @transform_6(%arg0: i32) -> (i32, i32) {
    %c0_i32 = arith.constant 0 : i32
    %c0_i32_0 = arith.constant 0 : i32
    %c0_i32_1 = arith.constant 0 : i32
    return %c0_i32, %c0_i32_0 : i32, i32
  }
  func.func @transform_7(%arg0: i32) -> (i32, i32) {
    %c0_i32 = arith.constant 0 : i32
    %c0_i32_0 = arith.constant 0 : i32
    return %arg0, %c0_i32 : i32, i32
  }
}

</mosaic_0001>

<llo_original>
// kernel: tpu_custom_call.1
$region0: #{tpu_custom_call.1}
  #allocation0 [shape = 'u32[]', space=smem, size = 0x4, offset = 0x4, fixed_abs, tag = 'smem constant byte address 0x4 - core index']
  #allocation1 [shape = 'u32[72,128]{1,0:T(1,128)}', space=vmem, size = 0x9000, scoped, tag = 'internal scratch']
  %s0 = inlined_call_operand.vmem [shape: f32[8,41], index: 0, kind: input, shape index: {}]
  %s1 = inlined_call_operand.vmem [shape: bf16[41,64], index: 1, kind: input, shape index: {}]
  %s2 = inlined_call_operand.vmem [shape: f32[1,64], index: 2, kind: input, shape index: {}]
  %s3 = inlined_call_operand.vmem [shape: bf16[64,32], index: 3, kind: input, shape index: {}]
  %s4 = inlined_call_operand.vmem [shape: f32[1,32], index: 4, kind: input, shape index: {}]
  %s5 = inlined_call_operand.vmem [shape: bf16[32,5], index: 5, kind: input, shape index: {}]
  %s6 = inlined_call_operand.vmem [shape: f32[1,5], index: 6, kind: input, shape index: {}]
  %s7 = inlined_call_operand.hbm [shape: f32[8,5], index: 7, kind: output, shape index: {}]
  %s8 = sld [smem:[#allocation0]]
  $region38: #{tpu_custom_call.1} parent=0
    _
  %s10 = ssub.s32 1, %s8
  %s11 = scalar_select 0, %s10, %s8
  $region1: #{tpu_custom_call.1} parent=0
    #allocation2 [shape = 'u8[4096]{0}', space=vmem, size = 0x1000, scoped, tag = 'output window, operand 0, single buffered']
    #allocation3 [shape = 's32[1]{0}', space=sflag, size = 0x4, scoped, tag = 'scoped memory for tpu_custom_call.1']
    %12 = vsyncpa [#allocation3], 0
    // Predicated region
    $region2: #{tpu_custom_call.1} parent=1 // pred_check
      _
    $region3: #{tpu_custom_call.1} parent=1 // pred_check_branch
      %14 = sbr.rel (0) target = $region5
    $region4: #{tpu_custom_call.1} parent=1 // pred_region
      _
    $region5: #{tpu_custom_call.1} parent=1 // pred_fallthru
      _
    // Predicated region
    $region6: #{tpu_custom_call.1} parent=1 // pred_check
      _
    $region7: #{tpu_custom_call.1} parent=1 // pred_check_branch
      %16 = sbr.rel (0) target = $region9
    $region8: #{tpu_custom_call.1} parent=1 // pred_region
      _
    $region9: #{tpu_custom_call.1} parent=1 // pred_fallthru
      _
    // Predicated region
    $region10: #{tpu_custom_call.1} parent=1 // pred_check
      _
    $region11: #{tpu_custom_call.1} parent=1 // pred_check_branch
      %18 = sbr.rel (0) target = $region13
    $region12: #{tpu_custom_call.1} parent=1 // pred_region
      _
    $region13: #{tpu_custom_call.1} parent=1 // pred_fallthru
      _
    // Predicated region
    $region14: #{tpu_custom_call.1} parent=1 // pred_check
      _
    $region15: #{tpu_custom_call.1} parent=1 // pred_check_branch
      %20 = sbr.rel (0) target = $region17
    $region16: #{tpu_custom_call.1} parent=1 // pred_region
      _
    $region17: #{tpu_custom_call.1} parent=1 // pred_fallthru
      _
    // Predicated region
    $region18: #{tpu_custom_call.1} parent=1 // pred_check
      _
    $region19: #{tpu_custom_call.1} parent=1 // pred_check_branch
      %22 = sbr.rel (0) target = $region21
    $region20: #{tpu_custom_call.1} parent=1 // pred_region
      _
    $region21: #{tpu_custom_call.1} parent=1 // pred_fallthru
      _
    // Predicated region
    $region22: #{tpu_custom_call.1} parent=1 // pred_check
      _
    $region23: #{tpu_custom_call.1} parent=1 // pred_check_branch
      %24 = sbr.rel (0) target = $region25
    $region24: #{tpu_custom_call.1} parent=1 // pred_region
      _
    $region25: #{tpu_custom_call.1} parent=1 // pred_fallthru
      _
    // Predicated region
    $region26: #{tpu_custom_call.1} parent=1 // pred_check
      _
    $region27: #{tpu_custom_call.1} parent=1 // pred_check_branch
      %26 = sbr.rel (0) target = $region29
    $region28: #{tpu_custom_call.1} parent=1 // pred_region
      _
    $region29: #{tpu_custom_call.1} parent=1 // pred_fallthru
      _
    %v28 = vld [vmem:[%s0] sm:$0xff]
    %v29 = vpack.c.bf16 %v28, %v28
    %v30 = vld [vmem:[%s1] sm:$0xf]
    %v31 = vld [vmem:[%s1 + $0x4] sm:$0xf]
    %v32 = vld [vmem:[%s1 + $0x8] sm:$0xf]
    %v33 = vld [vmem:[%s1 + $0xc] sm:$0xf]
    %v34 = vld [vmem:[%s1 + $0x10] sm:$0xf]
    %v35 = vld [vmem:[%s1 + $0x14] sm:$0x1]
    %v36 = vld [vmem:[%s2] sm:$0x1]
    %v38 = vperm.slane %v36, 0
    %v46 = vunpack.c.l.b16 %v30
    %v47 = vunpack.c.l.b16 %v31
    %v48 = vunpack.c.l.b16 %v32
    %v49 = vunpack.c.l.b16 %v33
    %v50 = vunpack.c.l.b16 %v34
    %v51 = vunpack.c.l.b16 %v35
    %v52 = vpack.c.b16 %v47, %v46
    %v53 = vpack.c.b16 %v49, %v48
    %v54 = vpack.c.b16 %v51, %v50
    %vm57 = vcmask 334848
    %v59 = vsel %vm57, %v29, 0
    %vm61 = vcmask 1043456
    %vm62 = vcmask 1044480
    %v63 = vsel %vm61, 4294967295, 65535
    %v64 = vsel %vm62, %v63, 0
    %v66 = vand.u32 %v54, %v64
    %68 = vmatpush.bf16.msra.mxu0 0
    %69 = vmatpush.bf16.msra.mxu0 0
    %70 = vmatpush.bf16.msra.mxu0 0
    %71 = vmatpush.bf16.msra.mxu0 0
    %72 = vmatpush.bf16.msra.mxu0 0
    %73 = vmatpush.bf16.msra.mxu0 %v66
    %74 = vmatpush.bf16.msra.mxu0 %v53
    %75 = vmatpush.bf16.msra.mxu0 %v52
    %76 = vmatmul.bf16.gmra.mxu0 %v59
    %v77 = vpop.f32.mrf.mxu0
    %v78 = vadd.f32 %v38, %v77
    %v79 = vpop.f32.mrf.mxu0
    %80 = vdwg.mxu0
    %v81 = vmax.f32 %v78, 0.0
    %v82 = vpack.c.bf16 %v81, %v81
    %v83 = vld [vmem:[%s3] sm:$0xf]
    %v84 = vld [vmem:[%s3 + $0x4] sm:$0xf]
    %v85 = vld [vmem:[%s3 + $0x8] sm:$0xf]
    %v86 = vld [vmem:[%s3 + $0xc] sm:$0xf]
    %v87 = vld [vmem:[%s3 + $0x10] sm:$0xf]
    %v88 = vld [vmem:[%s3 + $0x14] sm:$0xf]
    %v89 = vld [vmem:[%s3 + $0x18] sm:$0xf]
    %v90 = vld [vmem:[%s3 + $0x1c] sm:$0xf]
    %v91 = vld [vmem:[%s4] sm:$0x1]
    %v93 = vperm.slane %v91, 0
    %v103 = vunpack.c.l.b16 %v83
    %v104 = vunpack.c.l.b16 %v84
    %v105 = vunpack.c.l.b16 %v85
    %v106 = vunpack.c.l.b16 %v86
    %v107 = vunpack.c.l.b16 %v87
    %v108 = vunpack.c.l.b16 %v88
    %v109 = vunpack.c.l.b16 %v89
    %v110 = vunpack.c.l.b16 %v90
    %v111 = vpack.c.b16 %v104, %v103
    %v112 = vpack.c.b16 %v106, %v105
    %v113 = vpack.c.b16 %v108, %v107
    %v114 = vpack.c.b16 %v110, %v109
    %vm119 = vcmask 523264
    %v121 = vsel %vm119, %v82, 0
    %123 = vmatpush.bf16.msra.mxu0 0
    %124 = vmatpush.bf16.msra.mxu0 0
    %125 = vmatpush.bf16.msra.mxu0 0
    %126 = vmatpush.bf16.msra.mxu0 0
    %127 = vmatpush.bf16.msra.mxu0 %v114
    %128 = vmatpush.bf16.msra.mxu0 %v113
    %129 = vmatpush.bf16.msra.mxu0 %v112
    %130 = vmatpush.bf16.msra.mxu0 %v111
    %131 = vmatmul.bf16.gmra.mxu0 %v121
    %v132 = vpop.f32.mrf.mxu0
    %v133 = vadd.f32 %v93, %v132
    %v134 = vpop.f32.mrf.mxu0
    %135 = vdwg.mxu0
    %v136 = vmax.f32 %v133, 0.0
    %v137 = vpack.c.bf16 %v136, %v136
    %v138 = vld [vmem:[%s5] sm:$0xf]
    %v139 = vld [vmem:[%s5 + $0x4] sm:$0xf]
    %v140 = vld [vmem:[%s5 + $0x8] sm:$0xf]
    %v141 = vld [vmem:[%s5 + $0xc] sm:$0xf]
    %v142 = vld [vmem:[%s6] sm:$0x1]
    %v144 = vperm.slane %v142, 0
    %v150 = vunpack.c.l.b16 %v138
    %v151 = vunpack.c.l.b16 %v139
    %v152 = vunpack.c.l.b16 %v140
    %v153 = vunpack.c.l.b16 %v141
    %v154 = vpack.c.b16 %v151, %v150
    %v155 = vpack.c.b16 %v153, %v152
    %vm158 = vcmask 261120
    %v160 = vsel %vm158, %v137, 0
    %162 = vmatpush.bf16.msra.mxu0 0
    %163 = vmatpush.bf16.msra.mxu0 0
    %164 = vmatpush.bf16.msra.mxu0 0
    %165 = vmatpush.bf16.msra.mxu0 0
    %166 = vmatpush.bf16.msra.mxu0 0
    %167 = vmatpush.bf16.msra.mxu0 0
    %168 = vmatpush.bf16.msra.mxu0 %v155
    %169 = vmatpush.bf16.msra.mxu0 %v154
    %170 = vmatmul.bf16.gmra.mxu0 %v160
    %v171 = vpop.f32.mrf.mxu0
    %v172 = vadd.f32 %v144, %v171
    %v173 = vpop.f32.mrf.mxu0
    %174 = vdwg.mxu0
    %vm175 = vcmask 39936
    %176 = vst.msk [vmem:[#allocation2] sm:$0xff] %vm175, %v172
    // Predicated region
    $region30: #{tpu_custom_call.1} parent=1 // pred_check
      _
    $region31: #{tpu_custom_call.1} parent=1 // pred_check_branch
      %178 = sbr.rel (0) target = $region33
    $region32: #{tpu_custom_call.1} parent=1 // pred_region
      %180 = vsyncadd [#allocation3], 0
      %s182 = sshll.u32 [#allocation2], 4
      %s183 = int_to_ptr.vmem [resolvable:$true] %s182
      %s184 = sshll.u32 %s7, 4
      %s185 = int_to_ptr.hbm [resolvable:$true] %s184
      %187 = dma.vmem_to_hbm [thread:$0]  %s183, 128, %s185, [#allocation3]
    $region33: #{tpu_custom_call.1} parent=1 // pred_fallthru
      _
    // Predicated region
    $region34: #{tpu_custom_call.1} parent=1 // pred_check
      _
    $region35: #{tpu_custom_call.1} parent=1 // pred_check_branch
      %189 = sbr.rel (0) target = $region37
    $region36: #{tpu_custom_call.1} parent=1 // pred_region
      %191 = dma.done [#allocation3], 128
    $region37: #{tpu_custom_call.1} parent=1 // pred_fallthru
      _
    %192 = vsyncpa [#allocation3], 1

</llo_original>
